<compile_context>
chip_gen: v6e
topology: v6e:2x2x1
jax: 0.10.0
libtpu: 0.0.40
codegen_flags: <defaults>
</compile_context>

<pallas_src>
import jax
import jax.numpy as jnp
import numpy as np
from jax.experimental import pallas as pl
from jax.experimental.pallas import tpu as pltpu

_C1 = 16   # conv1 / conv2 output channels (fixed by the module)
_KH = 3    # conv kernel size


def _derive_dims(h, w):
    ho1, wo1 = h, w                        # conv1: 3x3, stride 1, pad 1
    ho2 = (h + 4 - _KH) // 2 + 1           # conv2: 3x3, stride 2, pad 2
    wo2 = (w + 4 - _KH) // 2 + 1
    return ho1, wo1, ho2, wo2


def prepare_params(params, image_shape):
    """One-time host-side conversion of PyTorch-layout parameters into
    full-image Toeplitz matmul weights (zero padding folded in)."""
    c, h, w = image_shape
    ho1, wo1, ho2, wo2 = _derive_dims(h, w)

    w1 = np.asarray(params["w1"], np.float32)   # (16, c, 3, 3)
    b1 = np.asarray(params["b1"], np.float32)   # (16,)
    w2 = np.asarray(params["w2"], np.float32)   # (16, 16, 3, 3)
    b2 = np.asarray(params["b2"], np.float32)   # (16,)
    w3 = np.asarray(params["w3"], np.float32)   # (out, 16*ho2*wo2)
    b3 = np.asarray(params["b3"], np.float32)   # (out,)

    # conv1 (stride 1, pad 1): x[(hi*W+wi)*C+ci] -> y1[(ho*Wo1+wo)*16+o]
    t1 = np.zeros((h, w, c, ho1, wo1, _C1), np.float32)
    for kh in range(_KH):
        for kw in range(_KH):
            tap = w1[:, :, kh, kw].T            # (c, 16)
            for ho in range(ho1):
                hi = ho + kh - 1
                if not 0 <= hi < h:
                    continue
                for wo in range(wo1):
                    wi = wo + kw - 1
                    if 0 <= wi < w:
                        t1[hi, wi, :, ho, wo, :] = tap
    w1m = t1.reshape(h * w * c, ho1 * wo1 * _C1)
    b1r = np.tile(b1, ho1 * wo1).reshape(1, -1)

    # conv2 (stride 2, pad 2): y1[(hi*Wo1+wi)*16+ci] -> y2[(ho*Wo2+wo)*16+o]
    t2 = np.zeros((ho1, wo1, _C1, ho2, wo2, _C1), np.float32)
    for kh in range(_KH):
        for kw in range(_KH):
            tap = w2[:, :, kh, kw].T            # (16, 16)
            for ho in range(ho2):
                hi = 2 * ho + kh - 2
                if not 0 <= hi < ho1:
                    continue
                for wo in range(wo2):
                    wi = 2 * wo + kw - 2
                    if 0 <= wi < wo1:
                        t2[hi, wi, :, ho, wo, :] = tap
    w2m = t2.reshape(ho1 * wo1 * _C1, ho2 * wo2 * _C1)
    b2r = np.tile(b2, ho2 * wo2).reshape(1, -1)

    # Linear: pre-transpose to (in, out) and permute rows from PyTorch's NCHW
    # flatten order (c, h, w) to the kernel's (h, w, c) feature order.
    out_features = w3.shape[0]
    assert w3.shape[1] == _C1 * ho2 * wo2, \
        "image_shape inconsistent with conv_output_size"
    w3m = (w3.T.reshape(_C1, ho2, wo2, out_features)
               .transpose(1, 2, 0, 3)
               .reshape(ho2 * wo2 * _C1, out_features))
    b3r = b3.reshape(1, out_features)

    return {k: jnp.asarray(v) for k, v in
            dict(w1m=w1m, b1r=b1r, w2m=w2m, b2r=b2r, w3m=w3m, b3r=b3r).items()}


def _maze_head_kernel(x_ref, w1_ref, b1_ref, w2_ref, b2_ref, w3_ref, b3_ref,
                      out_ref):
    # Three batched MXU matmuls + VPU bias/ReLU; activations live in vregs/VMEM.
    h1 = jnp.maximum(
        jnp.dot(x_ref[...], w1_ref[...], preferred_element_type=jnp.float32)
        + b1_ref[...], 0.0)
    h2 = jnp.maximum(
        jnp.dot(h1, w2_ref[...], preferred_element_type=jnp.float32)
        + b2_ref[...], 0.0)
    out_ref[...] = jnp.maximum(
        jnp.dot(h2, w3_ref[...], preferred_element_type=jnp.float32)
        + b3_ref[...], 0.0)


def maze_head_forward(state_nchw, kparams, *, batch_tile=512):
    """Fused MazeHead forward.  state: [B, C, H, W] float32 (PyTorch NCHW)."""
    B, C, H, W = state_nchw.shape
    K1 = H * W * C
    N1 = kparams["w1m"].shape[1]
    N2 = kparams["w2m"].shape[1]
    NO = kparams["w3m"].shape[1]
    assert kparams["w1m"].shape[0] == K1 and kparams["w3m"].shape[0] == N2

    # Layout-only glue in XLA: NCHW -> (B, H*W*C) with channels fastest, which
    # is exactly the row order the Toeplitz weights were built for.
    x2d = jnp.transpose(state_nchw, (0, 2, 3, 1)).reshape(B, K1)
    x2d = x2d.astype(jnp.float32)

    # Batch tiling (tile must be a multiple of 8 or equal to B); zero-pad the
    # batch so every grid step sees a full tile.  ~1.9 MB VMEM per 512-image
    # tile -> far under the 64 MiB v7x / 128 MiB v5e/v6e VMEM.
    if B <= batch_tile:
        tb, Bp = B, B
    else:
        tb = batch_tile
        Bp = ((B + tb - 1) // tb) * tb
        x2d = jnp.pad(x2d, ((0, Bp - B), (0, 0)))
    grid = (Bp // tb,)

    flops = 2 * Bp * (K1 * N1 + N1 * N2 + N2 * NO)
    bytes_accessed = 4 * (Bp * (K1 + NO)
                          + sum(int(v.size) for v in kparams.values()))

    def const_spec(shape):
        # Weights / biases: full block, constant index map -> stay resident.
        return pl.BlockSpec(shape, lambda i: (0, 0))

    out = pl.pallas_call(
        _maze_head_kernel,
        out_shape=jax.ShapeDtypeStruct((Bp, NO), jnp.float32),
        grid=grid,
        in_specs=[
            pl.BlockSpec((tb, K1), lambda i: (i, 0)),   # x tile over batch
            const_spec((K1, N1)), const_spec((1, N1)),  # conv1 Toeplitz + bias
            const_spec((N1, N2)), const_spec((1, N2)),  # conv2 Toeplitz + bias
            const_spec((N2, NO)), const_spec((1, NO)),  # linear + bias
        ],
        out_specs=pl.BlockSpec((tb, NO), lambda i: (i, 0)),
        compiler_params=pltpu.CompilerParams(
            dimension_semantics=("parallel",)),
        cost_estimate=pl.CostEstimate(flops=flops, transcendentals=0,
                                      bytes_accessed=bytes_accessed),
    )(x2d, kparams["w1m"], kparams["b1r"], kparams["w2m"], kparams["b2r"],
      kparams["w3m"], kparams["b3r"])
    return out[:B] if Bp != B else out


def maze_head_reference(state, params):
    """Pure-JAX reference with PyTorch semantics (validation only)."""
    dn = ("NCHW", "OIHW", "NCHW")
    hp = jax.lax.Precision.HIGHEST
    y = jax.lax.conv_general_dilated(state, params["w1"], (1, 1),
                                     ((1, 1), (1, 1)), dimension_numbers=dn,
                                     precision=hp)
    y = jnp.maximum(y + params["b1"][None, :, None, None], 0.0)
    y = jax.lax.conv_general_dilated(y, params["w2"], (2, 2),
                                     ((2, 2), (2, 2)), dimension_numbers=dn,
                                     precision=hp)
    y = jnp.maximum(y + params["b2"][None, :, None, None], 0.0)
    y = y.reshape(y.shape[0], -1)                      # PyTorch NCHW flatten
    y = jnp.dot(y, params["w3"].T, precision=hp) + params["b3"]
    return jnp.maximum(y, 0.0)


def init_params(key, c):
    ks = jax.random.split(key, 6)
    scale = 0.05
    return {
        "w1": scale * jax.random.normal(ks[0], (16, c, 3, 3), jnp.float32),
        "b1": scale * jax.random.normal(ks[1], (16,), jnp.float32),
        "w2": scale * jax.random.normal(ks[2], (16, 16, 3, 3), jnp.float32),
        "b2": scale * jax.random.normal(ks[3], (16,), jnp.float32),
        "w3": scale * jax.random.normal(ks[4], (256, 256), jnp.float32),
        "b3": scale * jax.random.normal(ks[5], (256,), jnp.float32),
    }


if __name__ == "__main__":
    key = jax.random.PRNGKey(0)
    k_in, k_p = jax.random.split(key)
    # image_shape = (4, 5, 5): a 5x5 maze -> conv2 output is 16*4*4 = 256,
    # matching the module defaults conv_output_size=256, output_size=256.
    B, C, H, W = 2, 4, 5, 5
    state = jax.random.normal(k_in, (B, C, H, W), jnp.float32)
    params = init_params(k_p, C)
    kparams = prepare_params(params, (C, H, W))   # one-time weight relayout

    fwd = jax.jit(maze_head_forward)
    out = jax.block_until_ready(fwd(state, kparams))
    assert out.shape == (B, 256)
    assert out.dtype == jnp.float32

    ref = maze_head_reference(state, params)
    # Tighter than before (2e-3 vs 1e-2); headroom only for the case where the
    # f32 MXU passes are not bit-matched to XLA HIGHEST — any layout /
    # permutation regression produces O(0.1..1) errors and is still caught.
    max_diff = float(jnp.max(jnp.abs(out - ref)))
    assert bool(jnp.allclose(out, ref, atol=2e-3, rtol=2e-3)), (
        "mismatch vs reference: max|diff|=%e" % max_diff)
    print("KERNEL_OK")
</pallas_src>

<mosaic_0001>
module attributes {stable_mosaic.version = 11 : i64} {
  func.func @_maze_head_kernel(%arg0: i32, %arg1: memref<2x100xf32, #tpu.memory_space<vmem>>, %arg2: memref<100x400xf32, #tpu.memory_space<vmem>>, %arg3: memref<1x400xf32, #tpu.memory_space<vmem>>, %arg4: memref<400x256xf32, #tpu.memory_space<vmem>>, %arg5: memref<1x256xf32, #tpu.memory_space<vmem>>, %arg6: memref<256x256xf32, #tpu.memory_space<vmem>>, %arg7: memref<1x256xf32, #tpu.memory_space<vmem>>, %arg8: memref<2x256xf32, #tpu.memory_space<vmem>>) attributes {dimension_semantics = [#tpu.dimension_semantics<parallel>], iteration_bounds = array<i64: 1>, scalar_prefetch = 0 : i64, scratch_operands = 0 : i64, tpu.core_type = #tpu.core_type<tc>, window_params = [{transform_indices = @transform_0, window_bounds = array<i64: 2, 100>}, {pipeline_mode = #tpu.pipeline_mode<synchronous>, transform_indices = @transform_1, window_bounds = array<i64: 100, 400>}, {pipeline_mode = #tpu.pipeline_mode<synchronous>, transform_indices = @transform_2, window_bounds = array<i64: 1, 400>}, {pipeline_mode = #tpu.pipeline_mode<synchronous>, transform_indices = @transform_3, window_bounds = array<i64: 400, 256>}, {pipeline_mode = #tpu.pipeline_mode<synchronous>, transform_indices = @transform_4, window_bounds = array<i64: 1, 256>}, {pipeline_mode = #tpu.pipeline_mode<synchronous>, transform_indices = @transform_5, window_bounds = array<i64: 256, 256>}, {pipeline_mode = #tpu.pipeline_mode<synchronous>, transform_indices = @transform_6, window_bounds = array<i64: 1, 256>}, {transform_indices = @transform_7, window_bounds = array<i64: 2, 256>}]} {
    %c0 = arith.constant 0 : index
    %c0_0 = arith.constant 0 : index
    %0 = vector.load %arg1[%c0, %c0_0] : memref<2x100xf32, #tpu.memory_space<vmem>>, vector<2x100xf32>
    %c0_1 = arith.constant 0 : index
    %c0_2 = arith.constant 0 : index
    %1 = vector.load %arg2[%c0_1, %c0_2] : memref<100x400xf32, #tpu.memory_space<vmem>>, vector<100x400xf32>
    %cst = arith.constant dense<0.000000e+00> : vector<2x400xf32>
    %2 = tpu.matmul %0, %1, %cst {dimension_numbers = #tpu.dot_dimension_numbers<[1], [0], [0], [1], [0, 0, 1, 1], [], []>} : vector<2x100xf32>, vector<100x400xf32>, vector<2x400xf32> -> vector<2x400xf32>
    %c0_3 = arith.constant 0 : index
    %c0_4 = arith.constant 0 : index
    %3 = vector.load %arg3[%c0_3, %c0_4] : memref<1x400xf32, #tpu.memory_space<vmem>>, vector<1x400xf32>
    %4 = vector.broadcast %3 : vector<1x400xf32> to vector<2x400xf32>
    %5 = arith.addf %2, %4 : vector<2x400xf32>
    %cst_5 = arith.constant 0.000000e+00 : f32
    %6 = vector.broadcast %cst_5 : f32 to vector<2x400xf32>
    %7 = arith.maximumf %5, %6 : vector<2x400xf32>
    %c0_6 = arith.constant 0 : index
    %c0_7 = arith.constant 0 : index
    %8 = vector.load %arg4[%c0_6, %c0_7] : memref<400x256xf32, #tpu.memory_space<vmem>>, vector<400x256xf32>
    %cst_8 = arith.constant dense<0.000000e+00> : vector<2x256xf32>
    %9 = tpu.matmul %7, %8, %cst_8 {dimension_numbers = #tpu.dot_dimension_numbers<[1], [0], [0], [1], [0, 0, 1, 1], [], []>} : vector<2x400xf32>, vector<400x256xf32>, vector<2x256xf32> -> vector<2x256xf32>
    %c0_9 = arith.constant 0 : index
    %c0_10 = arith.constant 0 : index
    %10 = vector.load %arg5[%c0_9, %c0_10] : memref<1x256xf32, #tpu.memory_space<vmem>>, vector<1x256xf32>
    %11 = vector.broadcast %10 : vector<1x256xf32> to vector<2x256xf32>
    %12 = arith.addf %9, %11 : vector<2x256xf32>
    %cst_11 = arith.constant 0.000000e+00 : f32
    %13 = vector.broadcast %cst_11 : f32 to vector<2x256xf32>
    %14 = arith.maximumf %12, %13 : vector<2x256xf32>
    %c0_12 = arith.constant 0 : index
    %c0_13 = arith.constant 0 : index
    %15 = vector.load %arg6[%c0_12, %c0_13] : memref<256x256xf32, #tpu.memory_space<vmem>>, vector<256x256xf32>
    %cst_14 = arith.constant dense<0.000000e+00> : vector<2x256xf32>
    %16 = tpu.matmul %14, %15, %cst_14 {dimension_numbers = #tpu.dot_dimension_numbers<[1], [0], [0], [1], [0, 0, 1, 1], [], []>} : vector<2x256xf32>, vector<256x256xf32>, vector<2x256xf32> -> vector<2x256xf32>
    %c0_15 = arith.constant 0 : index
    %c0_16 = arith.constant 0 : index
    %17 = vector.load %arg7[%c0_15, %c0_16] : memref<1x256xf32, #tpu.memory_space<vmem>>, vector<1x256xf32>
    %18 = vector.broadcast %17 : vector<1x256xf32> to vector<2x256xf32>
    %19 = arith.addf %16, %18 : vector<2x256xf32>
    %cst_17 = arith.constant 0.000000e+00 : f32
    %20 = vector.broadcast %cst_17 : f32 to vector<2x256xf32>
    %21 = arith.maximumf %19, %20 : vector<2x256xf32>
    %c0_18 = arith.constant 0 : index
    %c0_19 = arith.constant 0 : index
    %22 = vector.load %arg8[%c0_18, %c0_19] : memref<2x256xf32, #tpu.memory_space<vmem>>, vector<2x256xf32>
    tpu.vector_store %arg8[%c0_18, %c0_19], %21 {strides = array<i32>} : memref<2x256xf32, #tpu.memory_space<vmem>>, vector<2x256xf32>,
    return
  }
  func.func @transform_0(%arg0: i32) -> (i32, i32) {
    %c0_i32 = arith.constant 0 : i32
    %c0_i32_0 = arith.constant 0 : i32
    return %arg0, %c0_i32 : i32, i32
  }
  func.func @transform_1(%arg0: i32) -> (i32, i32) {
    %c0_i32 = arith.constant 0 : i32
    %c0_i32_0 = arith.constant 0 : i32
    %c0_i32_1 = arith.constant 0 : i32
    return %c0_i32, %c0_i32_0 : i32, i32
  }
  func.func @transform_2(%arg0: i32) -> (i32, i32) {
    %c0_i32 = arith.constant 0 : i32
    %c0_i32_0 = arith.constant 0 : i32
    %c0_i32_1 = arith.constant 0 : i32
    return %c0_i32, %c0_i32_0 : i32, i32
  }
  func.func @transform_3(%arg0: i32) -> (i32, i32) {
    %c0_i32 = arith.constant 0 : i32
    %c0_i32_0 = arith.constant 0 : i32
    %c0_i32_1 = arith.constant 0 : i32
    return %c0_i32, %c0_i32_0 : i32, i32
  }
  func.func @transform_4(%arg0: i32) -> (i32, i32) {
    %c0_i32 = arith.constant 0 : i32
    %c0_i32_0 = arith.constant 0 : i32
    %c0_i32_1 = arith.constant 0 : i32
    return %c0_i32, %c0_i32_0 : i32, i32
  }
  func.func @transform_5(%arg0: i32) -> (i32, i32) {
    %c0_i32 = arith.constant 0 : i32
    %c0_i32_0 = arith.constant 0 : i32
    %c0_i32_1 = arith.constant 0 : i32
    return %c0_i32, %c0_i32_0 : i32, i32
  }
  func.func @transform_6(%arg0: i32) -> (i32, i32) {
    %c0_i32 = arith.constant 0 : i32
    %c0_i32_0 = arith.constant 0 : i32
    %c0_i32_1 = arith.constant 0 : i32
    return %c0_i32, %c0_i32_0 : i32, i32
  }
  func.func @transform_7(%arg0: i32) -> (i32, i32) {
    %c0_i32 = arith.constant 0 : i32
    %c0_i32_0 = arith.constant 0 : i32
    return %arg0, %c0_i32 : i32, i32
  }
}

</mosaic_0001>

<llo_original>
// kernel: maze_head_forward.1
$region0: #{maze_head_forward.1}
  #allocation0 [shape = 'u32[]', space=smem, size = 0x4, offset = 0x4, fixed_abs, tag = 'smem constant byte address 0x4 - core index']
  #allocation1 [shape = 'u32[144,128]{1,0:T(1,128)}', space=vmem, size = 0x12000, scoped, tag = 'internal scratch']
  %s0 = inlined_call_operand.vmem [shape: f32[2,100], index: 0, kind: input, shape index: {}]
  %s1 = inlined_call_operand.vmem [shape: f32[100,400], index: 1, kind: input, shape index: {}]
  %s2 = inlined_call_operand.vmem [shape: f32[1,400], index: 2, kind: input, shape index: {}]
  %s3 = inlined_call_operand.vmem [shape: f32[400,256], index: 3, kind: input, shape index: {}]
  %s4 = inlined_call_operand.vmem [shape: f32[1,256], index: 4, kind: input, shape index: {}]
  %s5 = inlined_call_operand.hbm [shape: f32[256,256], index: 5, kind: input, shape index: {}]
  %s6 = inlined_call_operand.vmem [shape: f32[1,256], index: 6, kind: input, shape index: {}]
  %s7 = inlined_call_operand.hbm [shape: f32[2,256], index: 7, kind: output, shape index: {}]
  %s8 = sld [smem:[#allocation0]]
  $region42: #{maze_head_forward.1} parent=0
    _
  %s10 = ssub.s32 1, %s8
  %s11 = scalar_select 0, %s10, %s8
  $region1: #{maze_head_forward.1} parent=0
    #allocation2 [shape = 'u8[262144]{0}', space=vmem, size = 0x40000, scoped, tag = 'input window, operand 5, single buffered']
    #allocation3 [shape = 's32[1]{0}', space=sflag, size = 0x4, scoped, tag = 'scoped memory for maze_head_forward.1']
    #allocation4 [shape = 's32[1]{0}', space=sflag, size = 0x4, scoped, tag = 'scoped memory for maze_head_forward.1']
    #allocation5 [shape = 'u8[2048]{0}', space=vmem, size = 0x800, scoped, tag = 'output window, operand 0, single buffered']
    %12 = vsyncpa [#allocation3], 0
    %13 = vsyncpa [#allocation4], 0
    // Predicated region
    $region2: #{maze_head_forward.1} parent=1 // pred_check
      _
    $region3: #{maze_head_forward.1} parent=1 // pred_check_branch
      %15 = sbr.rel (0) target = $region5
    $region4: #{maze_head_forward.1} parent=1 // pred_region
      _
    $region5: #{maze_head_forward.1} parent=1 // pred_fallthru
      _
    // Predicated region
    $region6: #{maze_head_forward.1} parent=1 // pred_check
      _
    $region7: #{maze_head_forward.1} parent=1 // pred_check_branch
      %17 = sbr.rel (0) target = $region9
    $region8: #{maze_head_forward.1} parent=1 // pred_region
      _
    $region9: #{maze_head_forward.1} parent=1 // pred_fallthru
      _
    // Predicated region
    $region10: #{maze_head_forward.1} parent=1 // pred_check
      _
    $region11: #{maze_head_forward.1} parent=1 // pred_check_branch
      %19 = sbr.rel (0) target = $region13
    $region12: #{maze_head_forward.1} parent=1 // pred_region
      _
    $region13: #{maze_head_forward.1} parent=1 // pred_fallthru
      _
    // Predicated region
    $region14: #{maze_head_forward.1} parent=1 // pred_check
      _
    $region15: #{maze_head_forward.1} parent=1 // pred_check_branch
      %21 = sbr.rel (0) target = $region17
    $region16: #{maze_head_forward.1} parent=1 // pred_region
      _
    $region17: #{maze_head_forward.1} parent=1 // pred_fallthru
      _
    // Predicated region
    $region18: #{maze_head_forward.1} parent=1 // pred_check
      _
    $region19: #{maze_head_forward.1} parent=1 // pred_check_branch
      %23 = sbr.rel (0) target = $region21
    $region20: #{maze_head_forward.1} parent=1 // pred_region
      _
    $region21: #{maze_head_forward.1} parent=1 // pred_fallthru
      _
    // Predicated region
    $region22: #{maze_head_forward.1} parent=1 // pred_check
      _
    $region23: #{maze_head_forward.1} parent=1 // pred_check_branch
      %25 = sbr.rel (0) target = $region25
    $region24: #{maze_head_forward.1} parent=1 // pred_region
      %s27 = ssub.s32 8192, 8192
      %28 = vsyncadd [#allocation3], %s27
      %s29 = sshll.u32 [#allocation2], 4
      %s30 = int_to_ptr.vmem [resolvable:$true] %s29
      %35 = dma.hbm_to_vmem [thread:$0]  %s5, 8192, %s30, [#allocation3], 256, 256, 16
    $region25: #{maze_head_forward.1} parent=1 // pred_fallthru
      _
    // Predicated region
    $region26: #{maze_head_forward.1} parent=1 // pred_check
      _
    $region27: #{maze_head_forward.1} parent=1 // pred_check_branch
      %37 = sbr.rel (0) target = $region29
    $region28: #{maze_head_forward.1} parent=1 // pred_region
      _
    $region29: #{maze_head_forward.1} parent=1 // pred_fallthru
      _
    // Predicated region
    $region30: #{maze_head_forward.1} parent=1 // pred_check
      _
    $region31: #{maze_head_forward.1} parent=1 // pred_check_branch
      %39 = sbr.rel (0) target = $region33
    $region32: #{maze_head_forward.1} parent=1 // pred_region
      %40 = dma.done [#allocation3], 8192
    $region33: #{maze_head_forward.1} parent=1 // pred_fallthru
      _
    %v41 = vld [vmem:[%s0] sm:$0x3]
    %v42 = vld [vmem:[%s1] sm:$0xff]
    %v43 = vld [vmem:[%s1 + $0x8] sm:$0xff]
    %v44 = vld [vmem:[%s1 + $0x10] sm:$0xff]
    %v45 = vld [vmem:[%s1 + $0x18] sm:$0xff]
    %v46 = vld [vmem:[%s1 + $0x20] sm:$0xff]
    %v47 = vld [vmem:[%s1 + $0x28] sm:$0xff]
    %v48 = vld [vmem:[%s1 + $0x30] sm:$0xff]
    %v49 = vld [vmem:[%s1 + $0x38] sm:$0xff]
    %v50 = vld [vmem:[%s1 + $0x40] sm:$0xff]
    %v51 = vld [vmem:[%s1 + $0x48] sm:$0xff]
    %v52 = vld [vmem:[%s1 + $0x50] sm:$0xff]
    %v53 = vld [vmem:[%s1 + $0x58] sm:$0xff]
    %v54 = vld [vmem:[%s1 + $0x60] sm:$0xff]
    %v55 = vld [vmem:[%s1 + $0x68] sm:$0xff]
    %v56 = vld [vmem:[%s1 + $0x70] sm:$0xff]
    %v57 = vld [vmem:[%s1 + $0x78] sm:$0xff]
    %v58 = vld [vmem:[%s1 + $0x80] sm:$0xff]
    %v59 = vld [vmem:[%s1 + $0x88] sm:$0xff]
    %v60 = vld [vmem:[%s1 + $0x90] sm:$0xff]
    %v61 = vld [vmem:[%s1 + $0x98] sm:$0xff]
    %v62 = vld [vmem:[%s1 + $0xa0] sm:$0xff]
    %v63 = vld [vmem:[%s1 + $0xa8] sm:$0xff]
    %v64 = vld [vmem:[%s1 + $0xb0] sm:$0xff]
    %v65 = vld [vmem:[%s1 + $0xb8] sm:$0xff]
    %v66 = vld [vmem:[%s1 + $0xc0] sm:$0xff]
    %v67 = vld [vmem:[%s1 + $0xc8] sm:$0xff]
    %v68 = vld [vmem:[%s1 + $0xd0] sm:$0xff]
    %v69 = vld [vmem:[%s1 + $0xd8] sm:$0xff]
    %v70 = vld [vmem:[%s1 + $0xe0] sm:$0xff]
    %v71 = vld [vmem:[%s1 + $0xe8] sm:$0xff]
    %v72 = vld [vmem:[%s1 + $0xf0] sm:$0xff]
    %v73 = vld [vmem:[%s1 + $0xf8] sm:$0xff]
    %v74 = vld [vmem:[%s1 + $0x100] sm:$0xff]
    %v75 = vld [vmem:[%s1 + $0x108] sm:$0xff]
    %v76 = vld [vmem:[%s1 + $0x110] sm:$0xff]
    %v77 = vld [vmem:[%s1 + $0x118] sm:$0xff]
    %v78 = vld [vmem:[%s1 + $0x120] sm:$0xff]
    %v79 = vld [vmem:[%s1 + $0x128] sm:$0xff]
    %v80 = vld [vmem:[%s1 + $0x130] sm:$0xff]
    %v81 = vld [vmem:[%s1 + $0x138] sm:$0xff]
    %v82 = vld [vmem:[%s1 + $0x140] sm:$0xff]
    %v83 = vld [vmem:[%s1 + $0x148] sm:$0xff]
    %v84 = vld [vmem:[%s1 + $0x150] sm:$0xff]
    %v85 = vld [vmem:[%s1 + $0x158] sm:$0xff]
    %v86 = vld [vmem:[%s1 + $0x160] sm:$0xff]
    %v87 = vld [vmem:[%s1 + $0x168] sm:$0xff]
    %v88 = vld [vmem:[%s1 + $0x170] sm:$0xff]
    %v89 = vld [vmem:[%s1 + $0x178] sm:$0xff]
    %v90 = vld [vmem:[%s1 + $0x180] sm:$0xf]
    %v91 = vld [vmem:[%s1 + $0x188] sm:$0xf]
    %v92 = vld [vmem:[%s1 + $0x190] sm:$0xf]
    %v93 = vld [vmem:[%s1 + $0x198] sm:$0xf]
    %v94 = vld [vmem:[%s2] sm:$0xf]
    %v96 = vlaneseq
    %v97 = vshrl.u32 %v96, 7
    %v98 = vsub.s32 0, %v97
    %v99 = vrot.slane %v94, %v98
    %v100 = vlaneseq
    %v101 = vshrl.u32 %v100, 7
    %v102 = vsub.s32 1, %v101
    %v103 = vrot.slane %v94, %v102
    %v104 = vlaneseq
    %v105 = vshrl.u32 %v104, 7
    %v106 = vsub.s32 2, %v105
    %v107 = vrot.slane %v94, %v106
    %v108 = vlaneseq
    %v109 = vshrl.u32 %v108, 7
    %v110 = vsub.s32 3, %v109
    %v111 = vrot.slane %v94, %v110
    %vm116 = vcmask 818176
    %v118 = vsel %vm116, %v41, 0
    %vm120 = vcmask 1043456
    %v122 = vsel %vm120, %v90, 0
    %v125 = vsel %vm120, %v91, 0
    %v128 = vsel %vm120, %v92, 0
    %v131 = vsel %vm120, %v93, 0
    %133 = vmatprep.subr.mxu0 0.0
    %134 = vmatpush1.msra.mxu0 0.0
    %135 = vmatprep.subr.mxu0 0.0
    %136 = vmatpush1.msra.mxu0 0.0
    %137 = vmatprep.subr.mxu0 0.0
    %138 = vmatpush1.msra.mxu0 0.0
    %139 = vmatprep.subr.mxu0 %v125
    %140 = vmatpush1.msra.mxu0 %v122
    %141 = vmatprep.subr.mxu0 %v87
    %142 = vmatpush1.msra.mxu0 %v86
    %143 = vmatprep.subr.mxu0 %v83
    %144 = vmatpush1.msra.mxu0 %v82
    %145 = vmatprep.subr.mxu0 %v79
    %146 = vmatpush1.msra.mxu0 %v78
    %147 = vmatprep.subr.mxu0 %v75
    %148 = vmatpush1.msra.mxu0 %v74
    %149 = vmatprep.subr.mxu0 %v71
    %150 = vmatpush1.msra.mxu0 %v70
    %151 = vmatprep.subr.mxu0 %v67
    %152 = vmatpush1.msra.mxu0 %v66
    %153 = vmatprep.subr.mxu0 %v63
    %154 = vmatpush1.msra.mxu0 %v62
    %155 = vmatprep.subr.mxu0 %v59
    %156 = vmatpush1.msra.mxu0 %v58
    %157 = vmatprep.subr.mxu0 %v55
    %158 = vmatpush1.msra.mxu0 %v54
    %159 = vmatprep.subr.mxu0 %v51
    %160 = vmatpush1.msra.mxu0 %v50
    %161 = vmatprep.subr.mxu0 %v47
    %162 = vmatpush1.msra.mxu0 %v46
    %163 = vmatprep.subr.mxu0 %v43
    %164 = vmatpush1.msra.mxu0 %v42
    %165 = vmatprep.subr.mxu0 0.0
    %166 = vmatpush2.msra.mxu0 0.0
    %167 = vmatprep.subr.mxu0 0.0
    %168 = vmatpush2.msra.mxu0 0.0
    %169 = vmatprep.subr.mxu0 0.0
    %170 = vmatpush2.msra.mxu0 0.0
    %171 = vmatprep.subr.mxu0 0.0
    %172 = vmatpush2.msra.mxu0 0.0
    %173 = vmatprep.subr.mxu0 0.0
    %174 = vmatpush2.msra.mxu0 0.0
    %175 = vmatprep.subr.mxu0 0.0
    %176 = vmatpush2.msra.mxu0 0.0
    %177 = vmatprep.subr.mxu0 0.0
    %178 = vmatpush2.msra.mxu0 0.0
    %179 = vmatprep.subr.mxu0 0.0
    %180 = vmatpush2.msra.mxu0 0.0
    %181 = vmatprep.subr.mxu0 0.0
    %182 = vmatpush2.msra.mxu0 0.0
    %183 = vmatprep.subr.mxu0 0.0
    %184 = vmatpush2.msra.mxu0 0.0
    %185 = vmatprep.subr.mxu0 0.0
    %186 = vmatpush2.msra.mxu0 0.0
    %187 = vmatprep.subr.mxu0 0.0
    %188 = vmatpush2.msra.mxu0 0.0
    %189 = vmatprep.subr.mxu0 0.0
    %190 = vmatpush2.msra.mxu0 0.0
    %191 = vmatprep.subr.mxu0 0.0
    %192 = vmatpush2.msra.mxu0 0.0
    %193 = vmatprep.subr.mxu0 0.0
    %194 = vmatpush2.msra.mxu0 0.0
    %195 = vmatprep.subr.mxu0 0.0
    %196 = vmatpush2.msra.mxu0 0.0
    %197 = vmatprep.mubr.f32.mxu0 0.0
    %198 = vmatmul.mubr.f32.gmra.mxu0 %v118
    %v199 = vpop.f32.mrf.mxu0
    %v200 = vadd.f32 %v99, %v199
    %v201 = vpop.f32.mrf.mxu0
    %v202 = vadd.f32 %v103, %v201
    %203 = vdwg.mxu0
    %204 = vmatprep.subr.mxu0 0.0
    %205 = vmatpush1.msra.mxu0 0.0
    %206 = vmatprep.subr.mxu0 0.0
    %207 = vmatpush1.msra.mxu0 0.0
    %208 = vmatprep.subr.mxu0 0.0
    %209 = vmatpush1.msra.mxu0 0.0
    %210 = vmatprep.subr.mxu0 %v131
    %211 = vmatpush1.msra.mxu0 %v128
    %212 = vmatprep.subr.mxu0 %v89
    %213 = vmatpush1.msra.mxu0 %v88
    %214 = vmatprep.subr.mxu0 %v85
    %215 = vmatpush1.msra.mxu0 %v84
    %216 = vmatprep.subr.mxu0 %v81
    %217 = vmatpush1.msra.mxu0 %v80
    %218 = vmatprep.subr.mxu0 %v77
    %219 = vmatpush1.msra.mxu0 %v76
    %220 = vmatprep.subr.mxu0 %v73
    %221 = vmatpush1.msra.mxu0 %v72
    %222 = vmatprep.subr.mxu0 %v69
    %223 = vmatpush1.msra.mxu0 %v68
    %224 = vmatprep.subr.mxu0 %v65
    %225 = vmatpush1.msra.mxu0 %v64
    %226 = vmatprep.subr.mxu0 %v61
    %227 = vmatpush1.msra.mxu0 %v60
    %228 = vmatprep.subr.mxu0 %v57
    %229 = vmatpush1.msra.mxu0 %v56
    %230 = vmatprep.subr.mxu0 %v53
    %231 = vmatpush1.msra.mxu0 %v52
    %232 = vmatprep.subr.mxu0 %v49
    %233 = vmatpush1.msra.mxu0 %v48
    %234 = vmatprep.subr.mxu0 %v45
    %235 = vmatpush1.msra.mxu0 %v44
    %236 = vmatprep.subr.mxu0 0.0
    %237 = vmatpush2.msra.mxu0 0.0
    %238 = vmatprep.subr.mxu0 0.0
    %239 = vmatpush2.msra.mxu0 0.0
    %240 = vmatprep.subr.mxu0 0.0
    %241 = vmatpush2.msra.mxu0 0.0
    %242 = vmatprep.subr.mxu0 0.0
    %243 = vmatpush2.msra.mxu0 0.0
    %244 = vmatprep.subr.mxu0 0.0
    %245 = vmatpush2.msra.mxu0 0.0
    %246 = vmatprep.subr.mxu0 0.0
    %247 = vmatpush2.msra.mxu0 0.0
    %248 = vmatprep.subr.mxu0 0.0
    %249 = vmatpush2.msra.mxu0 0.0
    %250 = vmatprep.subr.mxu0 0.0
    %251 = vmatpush2.msra.mxu0 0.0
    %252 = vmatprep.subr.mxu0 0.0
    %253 = vmatpush2.msra.mxu0 0.0
    %254 = vmatprep.subr.mxu0 0.0
    %255 = vmatpush2.msra.mxu0 0.0
    %256 = vmatprep.subr.mxu0 0.0
    %257 = vmatpush2.msra.mxu0 0.0
    %258 = vmatprep.subr.mxu0 0.0
    %259 = vmatpush2.msra.mxu0 0.0
    %260 = vmatprep.subr.mxu0 0.0
    %261 = vmatpush2.msra.mxu0 0.0
    %262 = vmatprep.subr.mxu0 0.0
    %263 = vmatpush2.msra.mxu0 0.0
    %264 = vmatprep.subr.mxu0 0.0
    %265 = vmatpush2.msra.mxu0 0.0
    %266 = vmatprep.subr.mxu0 0.0
    %267 = vmatpush2.msra.mxu0 0.0
    %268 = vmatprep.mubr.f32.mxu0 0.0
    %269 = vmatmul.mubr.f32.gmra.mxu0 %v118
    %v270 = vpop.f32.mrf.mxu0
    %v271 = vadd.f32 %v107, %v270
    %v272 = vpop.f32.mrf.mxu0
    %v273 = vadd.f32 %v111, %v272
    %274 = vdwg.mxu0
    %v275 = vmax.f32 %v200, 0.0
    %v276 = vmax.f32 %v202, 0.0
    %v277 = vmax.f32 %v271, 0.0
    %v278 = vmax.f32 %v273, 0.0
    %v279 = vld [vmem:[%s3] sm:$0xff]
    %v280 = vld [vmem:[%s3 + $0x8] sm:$0xff]
    %v281 = vld [vmem:[%s3 + $0x10] sm:$0xff]
    %v282 = vld [vmem:[%s3 + $0x18] sm:$0xff]
    %v283 = vld [vmem:[%s3 + $0x20] sm:$0xff]
    %v284 = vld [vmem:[%s3 + $0x28] sm:$0xff]
    %v285 = vld [vmem:[%s3 + $0x30] sm:$0xff]
    %v286 = vld [vmem:[%s3 + $0x38] sm:$0xff]
    %v287 = vld [vmem:[%s3 + $0x40] sm:$0xff]
    %v288 = vld [vmem:[%s3 + $0x48] sm:$0xff]
    %v289 = vld [vmem:[%s3 + $0x50] sm:$0xff]
    %v290 = vld [vmem:[%s3 + $0x58] sm:$0xff]
    %v291 = vld [vmem:[%s3 + $0x60] sm:$0xff]
    %v292 = vld [vmem:[%s3 + $0x68] sm:$0xff]
    %v293 = vld [vmem:[%s3 + $0x70] sm:$0xff]
    %v294 = vld [vmem:[%s3 + $0x78] sm:$0xff]
    %v295 = vld [vmem:[%s3 + $0x80] sm:$0xff]
    %v296 = vld [vmem:[%s3 + $0x88] sm:$0xff]
    %v297 = vld [vmem:[%s3 + $0x90] sm:$0xff]
    %v298 = vld [vmem:[%s3 + $0x98] sm:$0xff]
    %v299 = vld [vmem:[%s3 + $0xa0] sm:$0xff]
    %v300 = vld [vmem:[%s3 + $0xa8] sm:$0xff]
    %v301 = vld [vmem:[%s3 + $0xb0] sm:$0xff]
    %v302 = vld [vmem:[%s3 + $0xb8] sm:$0xff]
    %v303 = vld [vmem:[%s3 + $0xc0] sm:$0xff]
    %v304 = vld [vmem:[%s3 + $0xc8] sm:$0xff]
    %v305 = vld [vmem:[%s3 + $0xd0] sm:$0xff]
    %v306 = vld [vmem:[%s3 + $0xd8] sm:$0xff]
    %v307 = vld [vmem:[%s3 + $0xe0] sm:$0xff]
    %v308 = vld [vmem:[%s3 + $0xe8] sm:$0xff]
    %v309 = vld [vmem:[%s3 + $0xf0] sm:$0xff]
    %v310 = vld [vmem:[%s3 + $0xf8] sm:$0xff]
    %v311 = vld [vmem:[%s3 + $0x100] sm:$0xff]
    %v312 = vld [vmem:[%s3 + $0x108] sm:$0xff]
    %v313 = vld [vmem:[%s3 + $0x110] sm:$0xff]
    %v314 = vld [vmem:[%s3 + $0x118] sm:$0xff]
    %v315 = vld [vmem:[%s3 + $0x120] sm:$0xff]
    %v316 = vld [vmem:[%s3 + $0x128] sm:$0xff]
    %v317 = vld [vmem:[%s3 + $0x130] sm:$0xff]
    %v318 = vld [vmem:[%s3 + $0x138] sm:$0xff]
    %v319 = vld [vmem:[%s3 + $0x140] sm:$0xff]
    %v320 = vld [vmem:[%s3 + $0x148] sm:$0xff]
    %v321 = vld [vmem:[%s3 + $0x150] sm:$0xff]
    %v322 = vld [vmem:[%s3 + $0x158] sm:$0xff]
    %v323 = vld [vmem:[%s3 + $0x160] sm:$0xff]
    %v324 = vld [vmem:[%s3 + $0x168] sm:$0xff]
    %v325 = vld [vmem:[%s3 + $0x170] sm:$0xff]
    %v326 = vld [vmem:[%s3 + $0x178] sm:$0xff]
    %v327 = vld [vmem:[%s3 + $0x180] sm:$0xff]
    %v328 = vld [vmem:[%s3 + $0x188] sm:$0xff]
    %v329 = vld [vmem:[%s3 + $0x190] sm:$0xff]
    %v330 = vld [vmem:[%s3 + $0x198] sm:$0xff]
    %v331 = vld [vmem:[%s3 + $0x1a0] sm:$0xff]
    %v332 = vld [vmem:[%s3 + $0x1a8] sm:$0xff]
    %v333 = vld [vmem:[%s3 + $0x1b0] sm:$0xff]
    %v334 = vld [vmem:[%s3 + $0x1b8] sm:$0xff]
    %v335 = vld [vmem:[%s3 + $0x1c0] sm:$0xff]
    %v336 = vld [vmem:[%s3 + $0x1c8] sm:$0xff]
    %v337 = vld [vmem:[%s3 + $0x1d0] sm:$0xff]
    %v338 = vld [vmem:[%s3 + $0x1d8] sm:$0xff]
    %v339 = vld [vmem:[%s3 + $0x1e0] sm:$0xff]
    %v340 = vld [vmem:[%s3 + $0x1e8] sm:$0xff]
    %v341 = vld [vmem:[%s3 + $0x1f0] sm:$0xff]
    %v342 = vld [vmem:[%s3 + $0x1f8] sm:$0xff]
    %v343 = vld [vmem:[%s3 + $0x200] sm:$0xff]
    %v344 = vld [vmem:[%s3 + $0x208] sm:$0xff]
    %v345 = vld [vmem:[%s3 + $0x210] sm:$0xff]
    %v346 = vld [vmem:[%s3 + $0x218] sm:$0xff]
    %v347 = vld [vmem:[%s3 + $0x220] sm:$0xff]
    %v348 = vld [vmem:[%s3 + $0x228] sm:$0xff]
    %v349 = vld [vmem:[%s3 + $0x230] sm:$0xff]
    %v350 = vld [vmem:[%s3 + $0x238] sm:$0xff]
    %v351 = vld [vmem:[%s3 + $0x240] sm:$0xff]
    %v352 = vld [vmem:[%s3 + $0x248] sm:$0xff]
    %v353 = vld [vmem:[%s3 + $0x250] sm:$0xff]
    %v354 = vld [vmem:[%s3 + $0x258] sm:$0xff]
    %v355 = vld [vmem:[%s3 + $0x260] sm:$0xff]
    %v356 = vld [vmem:[%s3 + $0x268] sm:$0xff]
    %v357 = vld [vmem:[%s3 + $0x270] sm:$0xff]
    %v358 = vld [vmem:[%s3 + $0x278] sm:$0xff]
    %v359 = vld [vmem:[%s3 + $0x280] sm:$0xff]
    %v360 = vld [vmem:[%s3 + $0x288] sm:$0xff]
    %v361 = vld [vmem:[%s3 + $0x290] sm:$0xff]
    %v362 = vld [vmem:[%s3 + $0x298] sm:$0xff]
    %v363 = vld [vmem:[%s3 + $0x2a0] sm:$0xff]
    %v364 = vld [vmem:[%s3 + $0x2a8] sm:$0xff]
    %v365 = vld [vmem:[%s3 + $0x2b0] sm:$0xff]
    %v366 = vld [vmem:[%s3 + $0x2b8] sm:$0xff]
    %v367 = vld [vmem:[%s3 + $0x2c0] sm:$0xff]
    %v368 = vld [vmem:[%s3 + $0x2c8] sm:$0xff]
    %v369 = vld [vmem:[%s3 + $0x2d0] sm:$0xff]
    %v370 = vld [vmem:[%s3 + $0x2d8] sm:$0xff]
    %v371 = vld [vmem:[%s3 + $0x2e0] sm:$0xff]
    %v372 = vld [vmem:[%s3 + $0x2e8] sm:$0xff]
    %v373 = vld [vmem:[%s3 + $0x2f0] sm:$0xff]
    %v374 = vld [vmem:[%s3 + $0x2f8] sm:$0xff]
    %v375 = vld [vmem:[%s3 + $0x300] sm:$0xff]
    %v376 = vld [vmem:[%s3 + $0x308] sm:$0xff]
    %v377 = vld [vmem:[%s3 + $0x310] sm:$0xff]
    %v378 = vld [vmem:[%s3 + $0x318] sm:$0xff]
    %v379 = vld [vmem:[%s4] sm:$0x3]
    %v381 = vlaneseq
    %v382 = vshrl.u32 %v381, 7
    %v383 = vsub.s32 0, %v382
    %v384 = vrot.slane %v379, %v383
    %v385 = vlaneseq
    %v386 = vshrl.u32 %v385, 7
    %v387 = vsub.s32 1, %v386
    %v388 = vrot.slane %v379, %v387
    %vm391 = vcmask 130048
    %v393 = vsel %vm391, %v278, 0
    %395 = vmatprep.subr.mxu0 %v310
    %396 = vmatpush1.msra.mxu0 %v309
    %397 = vmatprep.subr.mxu0 %v308
    %398 = vmatpush1.msra.mxu0 %v307
    %399 = vmatprep.subr.mxu0 %v306
    %400 = vmatpush1.msra.mxu0 %v305
    %401 = vmatprep.subr.mxu0 %v304
    %402 = vmatpush1.msra.mxu0 %v303
    %403 = vmatprep.subr.mxu0 %v302
    %404 = vmatpush1.msra.mxu0 %v301
    %405 = vmatprep.subr.mxu0 %v300
    %406 = vmatpush1.msra.mxu0 %v299
    %407 = vmatprep.subr.mxu0 %v298
    %408 = vmatpush1.msra.mxu0 %v297
    %409 = vmatprep.subr.mxu0 %v296
    %410 = vmatpush1.msra.mxu0 %v295
    %411 = vmatprep.subr.mxu0 %v294
    %412 = vmatpush1.msra.mxu0 %v293
    %413 = vmatprep.subr.mxu0 %v292
    %414 = vmatpush1.msra.mxu0 %v291
    %415 = vmatprep.subr.mxu0 %v290
    %416 = vmatpush1.msra.mxu0 %v289
    %417 = vmatprep.subr.mxu0 %v288
    %418 = vmatpush1.msra.mxu0 %v287
    %419 = vmatprep.subr.mxu0 %v286
    %420 = vmatpush1.msra.mxu0 %v285
    %421 = vmatprep.subr.mxu0 %v284
    %422 = vmatpush1.msra.mxu0 %v283
    %423 = vmatprep.subr.mxu0 %v282
    %424 = vmatpush1.msra.mxu0 %v281
    %425 = vmatprep.subr.mxu0 %v280
    %426 = vmatpush1.msra.mxu0 %v279
    %427 = vmatprep.subr.mxu0 %v342
    %428 = vmatpush2.msra.mxu0 %v341
    %429 = vmatprep.subr.mxu0 %v340
    %430 = vmatpush2.msra.mxu0 %v339
    %431 = vmatprep.subr.mxu0 %v338
    %432 = vmatpush2.msra.mxu0 %v337
    %433 = vmatprep.subr.mxu0 %v336
    %434 = vmatpush2.msra.mxu0 %v335
    %435 = vmatprep.subr.mxu0 %v334
    %436 = vmatpush2.msra.mxu0 %v333
    %437 = vmatprep.subr.mxu0 %v332
    %438 = vmatpush2.msra.mxu0 %v331
    %439 = vmatprep.subr.mxu0 %v330
    %440 = vmatpush2.msra.mxu0 %v329
    %441 = vmatprep.subr.mxu0 %v328
    %442 = vmatpush2.msra.mxu0 %v327
    %443 = vmatprep.subr.mxu0 %v326
    %444 = vmatpush2.msra.mxu0 %v325
    %445 = vmatprep.subr.mxu0 %v324
    %446 = vmatpush2.msra.mxu0 %v323
    %447 = vmatprep.subr.mxu0 %v322
    %448 = vmatpush2.msra.mxu0 %v321
    %449 = vmatprep.subr.mxu0 %v320
    %450 = vmatpush2.msra.mxu0 %v319
    %451 = vmatprep.subr.mxu0 %v318
    %452 = vmatpush2.msra.mxu0 %v317
    %453 = vmatprep.subr.mxu0 %v316
    %454 = vmatpush2.msra.mxu0 %v315
    %455 = vmatprep.subr.mxu0 %v314
    %456 = vmatpush2.msra.mxu0 %v313
    %457 = vmatprep.subr.mxu0 %v312
    %458 = vmatpush2.msra.mxu0 %v311
    %459 = vmatprep.mubr.f32.mxu0 %v276
    %460 = vmatmul.mubr.f32.gmra.mxu0 %v275
    %v461 = vpop.f32.mrf.mxu0
    %v462 = vadd.f32 %v384, %v461
    %v463 = vpop.f32.mrf.mxu0
    %v464 = vadd.f32 %v388, %v463
    %465 = vdwg.mxu0
    %466 = vmatprep.subr.mxu0 %v374
    %467 = vmatpush1.msra.mxu0 %v373
    %468 = vmatprep.subr.mxu0 %v372
    %469 = vmatpush1.msra.mxu0 %v371
    %470 = vmatprep.subr.mxu0 %v370
    %471 = vmatpush1.msra.mxu0 %v369
    %472 = vmatprep.subr.mxu0 %v368
    %473 = vmatpush1.msra.mxu0 %v367
    %474 = vmatprep.subr.mxu0 %v366
    %475 = vmatpush1.msra.mxu0 %v365
    %476 = vmatprep.subr.mxu0 %v364
    %477 = vmatpush1.msra.mxu0 %v363
    %478 = vmatprep.subr.mxu0 %v362
    %479 = vmatpush1.msra.mxu0 %v361
    %480 = vmatprep.subr.mxu0 %v360
    %481 = vmatpush1.msra.mxu0 %v359
    %482 = vmatprep.subr.mxu0 %v358
    %483 = vmatpush1.msra.mxu0 %v357
    %484 = vmatprep.subr.mxu0 %v356
    %485 = vmatpush1.msra.mxu0 %v355
    %486 = vmatprep.subr.mxu0 %v354
    %487 = vmatpush1.msra.mxu0 %v353
    %488 = vmatprep.subr.mxu0 %v352
    %489 = vmatpush1.msra.mxu0 %v351
    %490 = vmatprep.subr.mxu0 %v350
    %491 = vmatpush1.msra.mxu0 %v349
    %492 = vmatprep.subr.mxu0 %v348
    %493 = vmatpush1.msra.mxu0 %v347
    %494 = vmatprep.subr.mxu0 %v346
    %495 = vmatpush1.msra.mxu0 %v345
    %496 = vmatprep.subr.mxu0 %v344
    %497 = vmatpush1.msra.mxu0 %v343
    %498 = vmatprep.subr.mxu0 0.0
    %499 = vmatpush2.msra.mxu0 0.0
    %500 = vmatprep.subr.mxu0 0.0
    %501 = vmatpush2.msra.mxu0 0.0
    %502 = vmatprep.subr.mxu0 0.0
    %503 = vmatpush2.msra.mxu0 0.0
    %504 = vmatprep.subr.mxu0 0.0
    %505 = vmatpush2.msra.mxu0 0.0
    %506 = vmatprep.subr.mxu0 0.0
    %507 = vmatpush2.msra.mxu0 0.0
    %508 = vmatprep.subr.mxu0 0.0
    %509 = vmatpush2.msra.mxu0 0.0
    %510 = vmatprep.subr.mxu0 0.0
    %511 = vmatpush2.msra.mxu0 0.0
    %512 = vmatprep.subr.mxu0 0.0
    %513 = vmatpush2.msra.mxu0 0.0
    %514 = vmatprep.subr.mxu0 0.0
    %515 = vmatpush2.msra.mxu0 0.0
    %516 = vmatprep.subr.mxu0 0.0
    %517 = vmatpush2.msra.mxu0 0.0
    %518 = vmatprep.subr.mxu0 0.0
    %519 = vmatpush2.msra.mxu0 0.0
    %520 = vmatprep.subr.mxu0 0.0
    %521 = vmatpush2.msra.mxu0 0.0
    %522 = vmatprep.subr.mxu0 0.0
    %523 = vmatpush2.msra.mxu0 0.0
    %524 = vmatprep.subr.mxu0 0.0
    %525 = vmatpush2.msra.mxu0 0.0
    %526 = vmatprep.subr.mxu0 %v378
    %527 = vmatpush2.msra.mxu0 %v377
    %528 = vmatprep.subr.mxu0 %v376
    %529 = vmatpush2.msra.mxu0 %v375
    %530 = vmatprep.mubr.f32.mxu0 %v393
    %531 = vmatmul.mubr.f32.gmra.mxu0 %v277
    %v532 = vpop.f32.mrf.mxu0
    %v533 = vadd.f32 %v462, %v532
    %v534 = vpop.f32.mrf.mxu0
    %v535 = vadd.f32 %v464, %v534
    %536 = vdwg.mxu0
    %v537 = vmax.f32 %v533, 0.0
    %v538 = vmax.f32 %v535, 0.0
    %v539 = vld [vmem:[#allocation2] sm:$0xff]
    %v540 = vld [vmem:[#allocation2 + $0x8] sm:$0xff]
    %v541 = vld [vmem:[#allocation2 + $0x10] sm:$0xff]
    %v542 = vld [vmem:[#allocation2 + $0x18] sm:$0xff]
    %v543 = vld [vmem:[#allocation2 + $0x20] sm:$0xff]
    %v544 = vld [vmem:[#allocation2 + $0x28] sm:$0xff]
    %v545 = vld [vmem:[#allocation2 + $0x30] sm:$0xff]
    %v546 = vld [vmem:[#allocation2 + $0x38] sm:$0xff]
    %v547 = vld [vmem:[#allocation2 + $0x40] sm:$0xff]
    %v548 = vld [vmem:[#allocation2 + $0x48] sm:$0xff]
    %v549 = vld [vmem:[#allocation2 + $0x50] sm:$0xff]
    %v550 = vld [vmem:[#allocation2 + $0x58] sm:$0xff]
    %v551 = vld [vmem:[#allocation2 + $0x60] sm:$0xff]
    %v552 = vld [vmem:[#allocation2 + $0x68] sm:$0xff]
    %v553 = vld [vmem:[#allocation2 + $0x70] sm:$0xff]
    %v554 = vld [vmem:[#allocation2 + $0x78] sm:$0xff]
    %v555 = vld [vmem:[#allocation2 + $0x80] sm:$0xff]
    %v556 = vld [vmem:[#allocation2 + $0x88] sm:$0xff]
    %v557 = vld [vmem:[#allocation2 + $0x90] sm:$0xff]
    %v558 = vld [vmem:[#allocation2 + $0x98] sm:$0xff]
    %v559 = vld [vmem:[#allocation2 + $0xa0] sm:$0xff]
    %v560 = vld [vmem:[#allocation2 + $0xa8] sm:$0xff]
    %v561 = vld [vmem:[#allocation2 + $0xb0] sm:$0xff]
    %v562 = vld [vmem:[#allocation2 + $0xb8] sm:$0xff]
    %v563 = vld [vmem:[#allocation2 + $0xc0] sm:$0xff]
    %v564 = vld [vmem:[#allocation2 + $0xc8] sm:$0xff]
    %v565 = vld [vmem:[#allocation2 + $0xd0] sm:$0xff]
    %v566 = vld [vmem:[#allocation2 + $0xd8] sm:$0xff]
    %v567 = vld [vmem:[#allocation2 + $0xe0] sm:$0xff]
    %v568 = vld [vmem:[#allocation2 + $0xe8] sm:$0xff]
    %v569 = vld [vmem:[#allocation2 + $0xf0] sm:$0xff]
    %v570 = vld [vmem:[#allocation2 + $0xf8] sm:$0xff]
    %v571 = vld [vmem:[#allocation2 + $0x100] sm:$0xff]
    %v572 = vld [vmem:[#allocation2 + $0x108] sm:$0xff]
    %v573 = vld [vmem:[#allocation2 + $0x110] sm:$0xff]
    %v574 = vld [vmem:[#allocation2 + $0x118] sm:$0xff]
    %v575 = vld [vmem:[#allocation2 + $0x120] sm:$0xff]
    %v576 = vld [vmem:[#allocation2 + $0x128] sm:$0xff]
    %v577 = vld [vmem:[#allocation2 + $0x130] sm:$0xff]
    %v578 = vld [vmem:[#allocation2 + $0x138] sm:$0xff]
    %v579 = vld [vmem:[#allocation2 + $0x140] sm:$0xff]
    %v580 = vld [vmem:[#allocation2 + $0x148] sm:$0xff]
    %v581 = vld [vmem:[#allocation2 + $0x150] sm:$0xff]
    %v582 = vld [vmem:[#allocation2 + $0x158] sm:$0xff]
    %v583 = vld [vmem:[#allocation2 + $0x160] sm:$0xff]
    %v584 = vld [vmem:[#allocation2 + $0x168] sm:$0xff]
    %v585 = vld [vmem:[#allocation2 + $0x170] sm:$0xff]
    %v586 = vld [vmem:[#allocation2 + $0x178] sm:$0xff]
    %v587 = vld [vmem:[#allocation2 + $0x180] sm:$0xff]
    %v588 = vld [vmem:[#allocation2 + $0x188] sm:$0xff]
    %v589 = vld [vmem:[#allocation2 + $0x190] sm:$0xff]
    %v590 = vld [vmem:[#allocation2 + $0x198] sm:$0xff]
    %v591 = vld [vmem:[#allocation2 + $0x1a0] sm:$0xff]
    %v592 = vld [vmem:[#allocation2 + $0x1a8] sm:$0xff]
    %v593 = vld [vmem:[#allocation2 + $0x1b0] sm:$0xff]
    %v594 = vld [vmem:[#allocation2 + $0x1b8] sm:$0xff]
    %v595 = vld [vmem:[#allocation2 + $0x1c0] sm:$0xff]
    %v596 = vld [vmem:[#allocation2 + $0x1c8] sm:$0xff]
    %v597 = vld [vmem:[#allocation2 + $0x1d0] sm:$0xff]
    %v598 = vld [vmem:[#allocation2 + $0x1d8] sm:$0xff]
    %v599 = vld [vmem:[#allocation2 + $0x1e0] sm:$0xff]
    %v600 = vld [vmem:[#allocation2 + $0x1e8] sm:$0xff]
    %v601 = vld [vmem:[#allocation2 + $0x1f0] sm:$0xff]
    %v602 = vld [vmem:[#allocation2 + $0x1f8] sm:$0xff]
    %v603 = vld [vmem:[%s6] sm:$0x3]
    %v605 = vlaneseq
    %v606 = vshrl.u32 %v605, 7
    %v607 = vsub.s32 0, %v606
    %v608 = vrot.slane %v603, %v607
    %v609 = vlaneseq
    %v610 = vshrl.u32 %v609, 7
    %v611 = vsub.s32 1, %v610
    %v612 = vrot.slane %v603, %v611
    %615 = vmatprep.subr.mxu0 %v570
    %616 = vmatpush1.msra.mxu0 %v569
    %617 = vmatprep.subr.mxu0 %v568
    %618 = vmatpush1.msra.mxu0 %v567
    %619 = vmatprep.subr.mxu0 %v566
    %620 = vmatpush1.msra.mxu0 %v565
    %621 = vmatprep.subr.mxu0 %v564
    %622 = vmatpush1.msra.mxu0 %v563
    %623 = vmatprep.subr.mxu0 %v562
    %624 = vmatpush1.msra.mxu0 %v561
    %625 = vmatprep.subr.mxu0 %v560
    %626 = vmatpush1.msra.mxu0 %v559
    %627 = vmatprep.subr.mxu0 %v558
    %628 = vmatpush1.msra.mxu0 %v557
    %629 = vmatprep.subr.mxu0 %v556
    %630 = vmatpush1.msra.mxu0 %v555
    %631 = vmatprep.subr.mxu0 %v554
    %632 = vmatpush1.msra.mxu0 %v553
    %633 = vmatprep.subr.mxu0 %v552
    %634 = vmatpush1.msra.mxu0 %v551
    %635 = vmatprep.subr.mxu0 %v550
    %636 = vmatpush1.msra.mxu0 %v549
    %637 = vmatprep.subr.mxu0 %v548
    %638 = vmatpush1.msra.mxu0 %v547
    %639 = vmatprep.subr.mxu0 %v546
    %640 = vmatpush1.msra.mxu0 %v545
    %641 = vmatprep.subr.mxu0 %v544
    %642 = vmatpush1.msra.mxu0 %v543
    %643 = vmatprep.subr.mxu0 %v542
    %644 = vmatpush1.msra.mxu0 %v541
    %645 = vmatprep.subr.mxu0 %v540
    %646 = vmatpush1.msra.mxu0 %v539
    %647 = vmatprep.subr.mxu0 %v602
    %648 = vmatpush2.msra.mxu0 %v601
    %649 = vmatprep.subr.mxu0 %v600
    %650 = vmatpush2.msra.mxu0 %v599
    %651 = vmatprep.subr.mxu0 %v598
    %652 = vmatpush2.msra.mxu0 %v597
    %653 = vmatprep.subr.mxu0 %v596
    %654 = vmatpush2.msra.mxu0 %v595
    %655 = vmatprep.subr.mxu0 %v594
    %656 = vmatpush2.msra.mxu0 %v593
    %657 = vmatprep.subr.mxu0 %v592
    %658 = vmatpush2.msra.mxu0 %v591
    %659 = vmatprep.subr.mxu0 %v590
    %660 = vmatpush2.msra.mxu0 %v589
    %661 = vmatprep.subr.mxu0 %v588
    %662 = vmatpush2.msra.mxu0 %v587
    %663 = vmatprep.subr.mxu0 %v586
    %664 = vmatpush2.msra.mxu0 %v585
    %665 = vmatprep.subr.mxu0 %v584
    %666 = vmatpush2.msra.mxu0 %v583
    %667 = vmatprep.subr.mxu0 %v582
    %668 = vmatpush2.msra.mxu0 %v581
    %669 = vmatprep.subr.mxu0 %v580
    %670 = vmatpush2.msra.mxu0 %v579
    %671 = vmatprep.subr.mxu0 %v578
    %672 = vmatpush2.msra.mxu0 %v577
    %673 = vmatprep.subr.mxu0 %v576
    %674 = vmatpush2.msra.mxu0 %v575
    %675 = vmatprep.subr.mxu0 %v574
    %676 = vmatpush2.msra.mxu0 %v573
    %677 = vmatprep.subr.mxu0 %v572
    %678 = vmatpush2.msra.mxu0 %v571
    %679 = vmatprep.mubr.f32.mxu0 %v538
    %680 = vmatmul.mubr.f32.gmra.mxu0 %v537
    %v681 = vpop.f32.mrf.mxu0
    %v682 = vadd.f32 %v608, %v681
    %v683 = vpop.f32.mrf.mxu0
    %v684 = vadd.f32 %v612, %v683
    %685 = vdwg.mxu0
    %v686 = vmax.f32 %v682, 0.0
    %v687 = vmax.f32 %v684, 0.0
    %v690 = vcombine.low %v686, %v687
    %v692 = vunpack.c.l.s4 1983009808
    %v693 = vunpack.c.0.s8 %v692
    %v694 = vlaneseq
    %v695 = vshrl.u32 %v694, 7
    %v696 = vsub.s32 %v693, %v695
    %v697 = vrot.slane %v690, %v696
    %699 = vst [vmem:[#allocation5] sm:$0xf] %v697
    // Predicated region
    $region34: #{maze_head_forward.1} parent=1 // pred_check
      _
    $region35: #{maze_head_forward.1} parent=1 // pred_check_branch
      %701 = sbr.rel (0) target = $region37
    $region36: #{maze_head_forward.1} parent=1 // pred_region
      %s703 = ssub.s32 64, 64
      %704 = vsyncadd [#allocation4], %s703
      %s706 = sshll.u32 [#allocation5], 4
      %s707 = int_to_ptr.vmem [resolvable:$true] %s706
      %709 = dma.vmem_to_hbm [thread:$0]  %s707, 64, %s7, [#allocation4]
    $region37: #{maze_head_forward.1} parent=1 // pred_fallthru
      _
    // Predicated region
    $region38: #{maze_head_forward.1} parent=1 // pred_check
      _
    $region39: #{maze_head_forward.1} parent=1 // pred_check_branch
      %711 = sbr.rel (0) target = $region41
    $region40: #{maze_head_forward.1} parent=1 // pred_region
      %712 = dma.done [#allocation4], 64
    $region41: #{maze_head_forward.1} parent=1 // pred_fallthru
      _
    %713 = vsyncpa [#allocation3], 1
    %714 = vsyncpa [#allocation4], 1

</llo_original>
